<compile_context>
chip_gen: v7x
topology: tpu7x:2x2x1
jax: 0.10.0
libtpu: 0.0.40
codegen_flags: <defaults>
</compile_context>

<pallas_src>
import numpy as np
import jax
import jax.numpy as jnp
from jax.experimental import pallas as pl
from jax.experimental.pallas import tpu as pltpu


def _contract_dense_kernel(d_ref, x_ref, w_ref, o_ref):
    """One S-tile:  out[b,co,s] = sum_ci (x[b,ci,s] + d[b,ci]) * w[ci,co,s].

    d_ref: [B, Cin]          (resident across all grid steps)
    x_ref: [B, Cin, S_tile]
    w_ref: [Cin, Cout, S_tile]
    o_ref: [B, Cout, S_tile]
    """
    cin = x_ref.shape[1]
    d = d_ref[...]                                        # [B, Cin], tiny

    acc = None
    # Static unroll over the (small) channel reduction — pure VPU FMAs with
    # S on the lane axis; no MXU, no cross-lane traffic.
    for ci in range(cin):
        xc = x_ref[:, ci:ci + 1, :] + d[:, ci:ci + 1, None]   # [B, 1, St]
        term = xc * w_ref[ci:ci + 1]                          # bcast -> [B, Cout, St]
        acc = term if acc is None else acc + term

    o_ref[...] = acc.astype(o_ref.dtype)                  # single lane-dense store


def _pick_s_tile(B, Cin, Cout, S, vmem_budget_bytes=8 * 1024 * 1024):
    """Largest 128-multiple S-tile that divides S and keeps the double-buffered
    working set comfortably inside the scoped-VMEM default (also safe for
    v7x's 64 MiB physical VMEM).  Falls back to a single full-S block."""
    bytes_per_mode = 4 * (B * Cin + Cin * Cout + B * Cout)   # fp32 x + w + out per mode
    for t in (1024, 512, 256, 128):
        if S % t == 0 and 2 * t * bytes_per_mode <= vmem_budget_bytes:
            return t
    return S                                               # small / odd S: grid=(1,)


def contract_dense_forward(x, weight, temb, dense_w, dense_b):
    """
    x:       [B, Cin, S]    float32
    weight:  [Cin, Cout, S] float32
    temb:    [B, T]         float32
    dense_w: [T, Cin]       float32   (== torch Linear.weight.T)
    dense_b: [Cin]          float32
    returns  [B, Cout, S]   float32
    """
    B, Cin, S = x.shape
    _, Cout, _ = weight.shape

    # Hoisted time-embedding projection (one [B,T]@[T,Cin] matmul): computed
    # once as a plain XLA op so every spectral-mode tile in the kernel is
    # independent (enables "parallel" grid semantics).
    d = jax.nn.silu(temb) @ dense_w + dense_b              # [B, Cin]

    s_tile = _pick_s_tile(B, Cin, Cout, S)
    grid = (S // s_tile,)

    out = pl.pallas_call(
        _contract_dense_kernel,
        out_shape=jax.ShapeDtypeStruct((B, Cout, S), jnp.float32),
        grid_spec=pltpu.PrefetchScalarGridSpec(
            num_scalar_prefetch=0,
            grid=grid,
            in_specs=[
                # d: constant index_map -> stays resident in VMEM, no per-step DMA.
                pl.BlockSpec((B, Cin), lambda s: (0, 0)),
                # x / weight: native layout, tiled only along the lane (S) axis.
                pl.BlockSpec((B, Cin, s_tile), lambda s: (0, 0, s)),
                pl.BlockSpec((Cin, Cout, s_tile), lambda s: (0, 0, s)),
            ],
            # Lane-dense output block: last dim is the full S tile.
            out_specs=pl.BlockSpec((B, Cout, s_tile), lambda s: (0, 0, s)),
        ),
        compiler_params=pltpu.CompilerParams(
            dimension_semantics=("parallel",),   # modes are independent -> megacore on v7x
        ),
    )(d, x, weight)

    return out


def default_init_uniform(key, shape, scale=1.0):
    """variance_scaling(scale, 'fan_avg', 'uniform') with in_axis=1, out_axis=0."""
    scale = 1e-10 if scale == 0 else scale
    receptive = np.prod(shape) / shape[1] / shape[0]
    fan_in = shape[1] * receptive
    fan_out = shape[0] * receptive
    variance = scale / ((fan_in + fan_out) / 2.0)
    return (jax.random.uniform(key, shape, jnp.float32) * 2.0 - 1.0) * np.sqrt(3.0 * variance)


if __name__ == "__main__":
    # Small shapes consistent with the module: hidden (== channels) = 4,
    # batch = 2, spectral modes (spatial) = 16, temb_dim = 8, out_channels = 4.
    B, Cin, Cout, S, T = 2, 4, 4, 16, 8
    key = jax.random.PRNGKey(0)
    k_x, k_w, k_t, k_d = jax.random.split(key, 4)

    x = jax.random.normal(k_x, (B, Cin, S), jnp.float32)
    # TODO(synk): real FactorizedSpectralConv weights are complex FFT
    # coefficients (possibly factorized, needing .to_tensor()); this harness
    # uses real float32 dense tensors for the contraction.
    weight = jax.random.normal(k_w, (Cin, Cout, S), jnp.float32) * 0.1
    temb = jax.random.normal(k_t, (B, T), jnp.float32)

    # Dense_0: Linear(temb_dim, hidden) with default_init() weights, zero bias.
    torch_style_w = default_init_uniform(k_d, (Cin, T))    # [out_feat, in_feat]
    dense_w = torch_style_w.T                               # [T, Cin] for x @ W
    dense_b = jnp.zeros((Cin,), jnp.float32)

    out = contract_dense_forward(x, weight, temb, dense_w, dense_b)
    out = jax.block_until_ready(out)

    # Pure-JAX reference for correctness check.
    d = jax.nn.silu(temb) @ dense_w + dense_b               # [B, Cin]
    x_shift = x + d[:, :, None]
    out_ref = jnp.einsum("abc,bdc->adc", x_shift, weight)
    assert out.shape == (B, Cout, S)
    np.testing.assert_allclose(np.asarray(out), np.asarray(out_ref), rtol=1e-5, atol=1e-5)

    print("KERNEL_OK")
</pallas_src>

<mosaic_0001>
module attributes {stable_mosaic.version = 11 : i64} {
  func.func @_contract_dense_kernel(%arg0: i32, %arg1: memref<2x4xf32, #tpu.memory_space<vmem>>, %arg2: memref<2x4x16xf32, #tpu.memory_space<vmem>>, %arg3: memref<4x4x16xf32, #tpu.memory_space<vmem>>, %arg4: memref<2x4x16xf32, #tpu.memory_space<vmem>>) attributes {dimension_semantics = [#tpu.dimension_semantics<parallel>], iteration_bounds = array<i64: 1>, scalar_prefetch = 0 : i64, scratch_operands = 0 : i64, tpu.core_type = #tpu.core_type<tc>, window_params = [{pipeline_mode = #tpu.pipeline_mode<synchronous>, transform_indices = @transform_0, window_bounds = array<i64: 2, 4>}, {transform_indices = @transform_1, window_bounds = array<i64: 2, 4, 16>}, {transform_indices = @transform_2, window_bounds = array<i64: 4, 4, 16>}, {transform_indices = @transform_3, window_bounds = array<i64: 2, 4, 16>}]} {
    %c0 = arith.constant 0 : index
    %c0_0 = arith.constant 0 : index
    %0 = vector.load %arg1[%c0, %c0_0] : memref<2x4xf32, #tpu.memory_space<vmem>>, vector<2x4xf32>
    %c0_1 = arith.constant 0 : index
    %c0_2 = arith.constant 0 : index
    %c0_3 = arith.constant 0 : index
    %1 = vector.load %arg2[%c0_1, %c0_2, %c0_3] : memref<2x4x16xf32, #tpu.memory_space<vmem>>, vector<2x1x16xf32>
    %2 = vector.extract_strided_slice %0 {offsets = [0, 0], sizes = [2, 1], strides = [1, 1]} : vector<2x4xf32> to vector<2x1xf32>
    %3 = vector.shape_cast %2 : vector<2x1xf32> to vector<2x1x1xf32>
    %4 = vector.broadcast %3 : vector<2x1x1xf32> to vector<2x1x16xf32>
    %5 = arith.addf %1, %4 : vector<2x1x16xf32>
    %c0_4 = arith.constant 0 : index
    %c0_5 = arith.constant 0 : index
    %c0_6 = arith.constant 0 : index
    %6 = vector.load %arg3[%c0_4, %c0_5, %c0_6] : memref<4x4x16xf32, #tpu.memory_space<vmem>>, vector<1x4x16xf32>
    %7 = vector.broadcast %5 : vector<2x1x16xf32> to vector<2x4x16xf32>
    %8 = vector.broadcast %6 : vector<1x4x16xf32> to vector<2x4x16xf32>
    %9 = arith.mulf %7, %8 : vector<2x4x16xf32>
    %c0_7 = arith.constant 0 : index
    %c1 = arith.constant 1 : index
    %c0_8 = arith.constant 0 : index
    %10 = vector.load %arg2[%c0_7, %c1, %c0_8] : memref<2x4x16xf32, #tpu.memory_space<vmem>>, vector<2x1x16xf32>
    %11 = vector.extract_strided_slice %0 {offsets = [0, 1], sizes = [2, 1], strides = [1, 1]} : vector<2x4xf32> to vector<2x1xf32>
    %12 = vector.shape_cast %11 : vector<2x1xf32> to vector<2x1x1xf32>
    %13 = vector.broadcast %12 : vector<2x1x1xf32> to vector<2x1x16xf32>
    %14 = arith.addf %10, %13 : vector<2x1x16xf32>
    %c1_9 = arith.constant 1 : index
    %c0_10 = arith.constant 0 : index
    %c0_11 = arith.constant 0 : index
    %15 = vector.load %arg3[%c1_9, %c0_10, %c0_11] : memref<4x4x16xf32, #tpu.memory_space<vmem>>, vector<1x4x16xf32>
    %16 = vector.broadcast %14 : vector<2x1x16xf32> to vector<2x4x16xf32>
    %17 = vector.broadcast %15 : vector<1x4x16xf32> to vector<2x4x16xf32>
    %18 = arith.mulf %16, %17 : vector<2x4x16xf32>
    %19 = arith.addf %9, %18 : vector<2x4x16xf32>
    %c0_12 = arith.constant 0 : index
    %c2 = arith.constant 2 : index
    %c0_13 = arith.constant 0 : index
    %20 = vector.load %arg2[%c0_12, %c2, %c0_13] : memref<2x4x16xf32, #tpu.memory_space<vmem>>, vector<2x1x16xf32>
    %21 = vector.extract_strided_slice %0 {offsets = [0, 2], sizes = [2, 1], strides = [1, 1]} : vector<2x4xf32> to vector<2x1xf32>
    %22 = vector.shape_cast %21 : vector<2x1xf32> to vector<2x1x1xf32>
    %23 = vector.broadcast %22 : vector<2x1x1xf32> to vector<2x1x16xf32>
    %24 = arith.addf %20, %23 : vector<2x1x16xf32>
    %c2_14 = arith.constant 2 : index
    %c0_15 = arith.constant 0 : index
    %c0_16 = arith.constant 0 : index
    %25 = vector.load %arg3[%c2_14, %c0_15, %c0_16] : memref<4x4x16xf32, #tpu.memory_space<vmem>>, vector<1x4x16xf32>
    %26 = vector.broadcast %24 : vector<2x1x16xf32> to vector<2x4x16xf32>
    %27 = vector.broadcast %25 : vector<1x4x16xf32> to vector<2x4x16xf32>
    %28 = arith.mulf %26, %27 : vector<2x4x16xf32>
    %29 = arith.addf %19, %28 : vector<2x4x16xf32>
    %c0_17 = arith.constant 0 : index
    %c3 = arith.constant 3 : index
    %c0_18 = arith.constant 0 : index
    %30 = vector.load %arg2[%c0_17, %c3, %c0_18] : memref<2x4x16xf32, #tpu.memory_space<vmem>>, vector<2x1x16xf32>
    %31 = vector.extract_strided_slice %0 {offsets = [0, 3], sizes = [2, 1], strides = [1, 1]} : vector<2x4xf32> to vector<2x1xf32>
    %32 = vector.shape_cast %31 : vector<2x1xf32> to vector<2x1x1xf32>
    %33 = vector.broadcast %32 : vector<2x1x1xf32> to vector<2x1x16xf32>
    %34 = arith.addf %30, %33 : vector<2x1x16xf32>
    %c3_19 = arith.constant 3 : index
    %c0_20 = arith.constant 0 : index
    %c0_21 = arith.constant 0 : index
    %35 = vector.load %arg3[%c3_19, %c0_20, %c0_21] : memref<4x4x16xf32, #tpu.memory_space<vmem>>, vector<1x4x16xf32>
    %36 = vector.broadcast %34 : vector<2x1x16xf32> to vector<2x4x16xf32>
    %37 = vector.broadcast %35 : vector<1x4x16xf32> to vector<2x4x16xf32>
    %38 = arith.mulf %36, %37 : vector<2x4x16xf32>
    %39 = arith.addf %29, %38 : vector<2x4x16xf32>
    %c0_22 = arith.constant 0 : index
    %c0_23 = arith.constant 0 : index
    %c0_24 = arith.constant 0 : index
    %40 = vector.load %arg4[%c0_22, %c0_23, %c0_24] : memref<2x4x16xf32, #tpu.memory_space<vmem>>, vector<2x4x16xf32>
    tpu.vector_store %arg4[%c0_22, %c0_23, %c0_24], %39 {strides = array<i32>} : memref<2x4x16xf32, #tpu.memory_space<vmem>>, vector<2x4x16xf32>,
    return
  }
  func.func @transform_0(%arg0: i32) -> (i32, i32) {
    %c0_i32 = arith.constant 0 : i32
    %c0_i32_0 = arith.constant 0 : i32
    %c0_i32_1 = arith.constant 0 : i32
    return %c0_i32, %c0_i32_0 : i32, i32
  }
  func.func @transform_1(%arg0: i32) -> (i32, i32, i32) {
    %c0_i32 = arith.constant 0 : i32
    %c0_i32_0 = arith.constant 0 : i32
    %c0_i32_1 = arith.constant 0 : i32
    return %c0_i32, %c0_i32_0, %arg0 : i32, i32, i32
  }
  func.func @transform_2(%arg0: i32) -> (i32, i32, i32) {
    %c0_i32 = arith.constant 0 : i32
    %c0_i32_0 = arith.constant 0 : i32
    %c0_i32_1 = arith.constant 0 : i32
    return %c0_i32, %c0_i32_0, %arg0 : i32, i32, i32
  }
  func.func @transform_3(%arg0: i32) -> (i32, i32, i32) {
    %c0_i32 = arith.constant 0 : i32
    %c0_i32_0 = arith.constant 0 : i32
    %c0_i32_1 = arith.constant 0 : i32
    return %c0_i32, %c0_i32_0, %arg0 : i32, i32, i32
  }
}

</mosaic_0001>

<llo_original>
// kernel: tpu_custom_call.1
$region0: #{tpu_custom_call.1}
  #allocation0 [shape = 'u32[]', space=smem, size = 0x4, offset = 0x4, fixed_abs, tag = 'smem constant byte address 0x4 - core index']
  #allocation1 [shape = 'u32[144,128]{1,0:T(1,128)}', space=vmem, size = 0x12000, scoped, tag = 'internal scratch']
  %s0 = inlined_call_operand.hbm [shape: f32[2,4], index: 0, kind: input, shape index: {}]
  %s1 = inlined_call_operand.hbm [shape: f32[2,4,16], index: 1, kind: input, shape index: {}]
  %s2 = inlined_call_operand.hbm [shape: f32[4,4,16], index: 2, kind: input, shape index: {}]
  %s3 = inlined_call_operand.hbm [shape: f32[2,4,16], index: 3, kind: output, shape index: {}]
  %s4 = sld [smem:[#allocation0]]
  $region34: #{tpu_custom_call.1} parent=0
    _
  %s6 = ssub.s32 1, %s4
  %s7 = scalar_select 0, %s6, %s4
  $region1: #{tpu_custom_call.1} parent=0
    #allocation2 [shape = 'u8[1024]{0}', space=vmem, size = 0x400, scoped, tag = 'input window, operand 0, single buffered']
    #allocation3 [shape = 's32[1]{0}', space=sflag, size = 0x4, scoped, tag = 'scoped memory for tpu_custom_call.1']
    #allocation4 [shape = 's32[1]{0}', space=sflag, size = 0x4, scoped, tag = 'scoped memory for tpu_custom_call.1']
    #allocation5 [shape = 'u8[4096]{0}', space=vmem, size = 0x1000, scoped, tag = 'input window, operand 1, single buffered']
    #allocation6 [shape = 's32[1]{0}', space=sflag, size = 0x4, scoped, tag = 'scoped memory for tpu_custom_call.1']
    #allocation7 [shape = 'u8[8192]{0}', space=vmem, size = 0x2000, scoped, tag = 'input window, operand 2, single buffered']
    #allocation8 [shape = 'u8[4096]{0}', space=vmem, size = 0x1000, scoped, tag = 'output window, operand 0, single buffered']
    %8 = vsyncpa [#allocation3], 0
    %9 = vsyncpa [#allocation6], 0
    %10 = vsyncpa [#allocation4], 0
    // Predicated region
    $region2: #{tpu_custom_call.1} parent=1 // pred_check
      _
    $region3: #{tpu_custom_call.1} parent=1 // pred_check_branch
      %12 = sbr.rel (0) target = $region5
    $region4: #{tpu_custom_call.1} parent=1 // pred_region
      %s14 = ssub.s32 32, 32
      %15 = vsyncadd [#allocation3], %s14
      %s17 = sshll.u32 [#allocation2], 4
      %s18 = int_to_ptr.vmem [resolvable:$true] %s17
      %20 = dma.hbm_to_vmem [thread:$0]  %s0, 32, %s18, [#allocation3]
    $region5: #{tpu_custom_call.1} parent=1 // pred_fallthru
      _
    // Predicated region
    $region6: #{tpu_custom_call.1} parent=1 // pred_check
      _
    $region7: #{tpu_custom_call.1} parent=1 // pred_check_branch
      %22 = sbr.rel (0) target = $region9
    $region8: #{tpu_custom_call.1} parent=1 // pred_region
      %s24 = ssub.s32 128, 128
      %25 = vsyncadd [#allocation6], %s24
      %s26 = sshll.u32 [#allocation5], 4
      %s27 = int_to_ptr.vmem [resolvable:$true] %s26
      %32 = dma.hbm_to_vmem [thread:$0]  %s1, 128, %s27, [#allocation6], 64, 64, 4
    $region9: #{tpu_custom_call.1} parent=1 // pred_fallthru
      _
    // Predicated region
    $region10: #{tpu_custom_call.1} parent=1 // pred_check
      _
    $region11: #{tpu_custom_call.1} parent=1 // pred_check_branch
      %34 = sbr.rel (0) target = $region13
    $region12: #{tpu_custom_call.1} parent=1 // pred_region
      %s36 = ssub.s32 256, 256
      %37 = vsyncadd [#allocation6], %s36
      %s38 = sshll.u32 [#allocation7], 4
      %s39 = int_to_ptr.vmem [resolvable:$true] %s38
      %44 = dma.hbm_to_vmem [thread:$0]  %s2, 256, %s39, [#allocation6], 64, 64, 4
    $region13: #{tpu_custom_call.1} parent=1 // pred_fallthru
      _
    // Predicated region
    $region14: #{tpu_custom_call.1} parent=1 // pred_check
      _
    $region15: #{tpu_custom_call.1} parent=1 // pred_check_branch
      %46 = sbr.rel (0) target = $region17
    $region16: #{tpu_custom_call.1} parent=1 // pred_region
      %47 = dma.done [#allocation3], 32
    $region17: #{tpu_custom_call.1} parent=1 // pred_fallthru
      _
    // Predicated region
    $region18: #{tpu_custom_call.1} parent=1 // pred_check
      _
    $region19: #{tpu_custom_call.1} parent=1 // pred_check_branch
      %49 = sbr.rel (0) target = $region21
    $region20: #{tpu_custom_call.1} parent=1 // pred_region
      %50 = dma.done [#allocation6], 128
    $region21: #{tpu_custom_call.1} parent=1 // pred_fallthru
      _
    // Predicated region
    $region22: #{tpu_custom_call.1} parent=1 // pred_check
      _
    $region23: #{tpu_custom_call.1} parent=1 // pred_check_branch
      %52 = sbr.rel (0) target = $region25
    $region24: #{tpu_custom_call.1} parent=1 // pred_region
      %53 = dma.done [#allocation6], 256
    $region25: #{tpu_custom_call.1} parent=1 // pred_fallthru
      _
    %v54 = vld [vmem:[#allocation2] sm:$0x3]
    %v55 = vld [vmem:[#allocation5] sm:$0x1]
    %v56 = vld [vmem:[#allocation5 + $0x4] sm:$0x1]
    %v59 = vunpack.c.l.s4 1966171168
    %v60 = vunpack.c.0.s8 %v59
    %v61 = vlaneseq
    %v62 = vshrl.u32 %v61, 7
    %v63 = vsub.s32 %v60, %v62
    %v64 = vrot.slane %v54, %v63
    %v65 = vcombine.high %v64, %v64
    %v67 = vunpack.c.l.s4 1966171168
    %v68 = vunpack.c.0.s8 %v67
    %v69 = vlaneseq
    %v70 = vshrl.u32 %v69, 7
    %v71 = vsub.s32 %v68, %v70
    %v72 = vrot.slane %v64, %v71
    %v74 = vunpack.c.l.s4 1966171168
    %v75 = vunpack.c.0.s8 %v74
    %v76 = vlaneseq
    %v77 = vshrl.u32 %v76, 7
    %v78 = vsub.s32 %v75, %v77
    %v79 = vrot.slane %v65, %v78
    %80 = vset.pattern.permute.xlu0 0
    %81 = vperm.xlu0 %80, %v72
    %v82 = vpop.permute.xlu0 %81
    %v84 = vlaneseq
    %v85 = vshrl.u32 %v84, 7
    %v86 = vsub.s32 0, %v85
    %v87 = vrot.slane %v82, %v86
    %88 = vset.pattern.permute.xlu0 0
    %89 = vperm.xlu0 %88, %v79
    %v90 = vpop.permute.xlu0 %89
    %v92 = vlaneseq
    %v93 = vshrl.u32 %v92, 7
    %v94 = vsub.s32 0, %v93
    %v95 = vrot.slane %v90, %v94
    %v96 = vadd.f32 %v55, %v87
    %v97 = vadd.f32 %v56, %v95
    %v98 = vld [vmem:[#allocation7] sm:$0xf]
    %v99 = vlaneseq
    %v100 = vshrl.u32 %v99, 7
    %v101 = vsub.s32 0, %v100
    %v102 = vrot.slane %v96, %v101
    %v103 = vlaneseq
    %v104 = vshrl.u32 %v103, 7
    %v105 = vsub.s32 0, %v104
    %v106 = vrot.slane %v97, %v105
    %v107 = vmul.f32 %v102, %v98
    %v108 = vmul.f32 %v106, %v98
    %v109 = vld [vmem:[#allocation5 + $0x1] sm:$0x1]
    %v110 = vld [vmem:[#allocation5 + $0x5] sm:$0x1]
    %111 = vset.pattern.permute.xlu0 1
    %112 = vperm.xlu0 %111, %v72
    %v113 = vpop.permute.xlu0 %112
    %v115 = vlaneseq
    %v116 = vshrl.u32 %v115, 7
    %v117 = vsub.s32 0, %v116
    %v118 = vrot.slane %v113, %v117
    %119 = vset.pattern.permute.xlu0 1
    %120 = vperm.xlu0 %119, %v79
    %v121 = vpop.permute.xlu0 %120
    %v123 = vlaneseq
    %v124 = vshrl.u32 %v123, 7
    %v125 = vsub.s32 0, %v124
    %v126 = vrot.slane %v121, %v125
    %v127 = vadd.f32 %v109, %v118
    %v128 = vadd.f32 %v110, %v126
    %s129 = scalar_lea.vmem [#allocation7], 4
    %v130 = vld [vmem:[%s129] sm:$0xf]
    %v131 = vlaneseq
    %v132 = vshrl.u32 %v131, 7
    %v133 = vsub.s32 0, %v132
    %v134 = vrot.slane %v127, %v133
    %v135 = vlaneseq
    %v136 = vshrl.u32 %v135, 7
    %v137 = vsub.s32 0, %v136
    %v138 = vrot.slane %v128, %v137
    %v139 = vmul.f32 %v134, %v130
    %v140 = vmul.f32 %v138, %v130
    %v141 = vadd.f32 %v107, %v139
    %v142 = vadd.f32 %v108, %v140
    %v143 = vld [vmem:[#allocation5 + $0x2] sm:$0x1]
    %v144 = vld [vmem:[#allocation5 + $0x6] sm:$0x1]
    %145 = vset.pattern.permute.xlu0 2
    %146 = vperm.xlu0 %145, %v72
    %v147 = vpop.permute.xlu0 %146
    %v149 = vlaneseq
    %v150 = vshrl.u32 %v149, 7
    %v151 = vsub.s32 0, %v150
    %v152 = vrot.slane %v147, %v151
    %153 = vset.pattern.permute.xlu0 2
    %154 = vperm.xlu0 %153, %v79
    %v155 = vpop.permute.xlu0 %154
    %v157 = vlaneseq
    %v158 = vshrl.u32 %v157, 7
    %v159 = vsub.s32 0, %v158
    %v160 = vrot.slane %v155, %v159
    %v161 = vadd.f32 %v143, %v152
    %v162 = vadd.f32 %v144, %v160
    %s163 = scalar_lea.vmem [#allocation7], 8
    %v164 = vld [vmem:[%s163] sm:$0xf]
    %v165 = vlaneseq
    %v166 = vshrl.u32 %v165, 7
    %v167 = vsub.s32 0, %v166
    %v168 = vrot.slane %v161, %v167
    %v169 = vlaneseq
    %v170 = vshrl.u32 %v169, 7
    %v171 = vsub.s32 0, %v170
    %v172 = vrot.slane %v162, %v171
    %v173 = vmul.f32 %v168, %v164
    %v174 = vmul.f32 %v172, %v164
    %v175 = vadd.f32 %v141, %v173
    %v176 = vadd.f32 %v142, %v174
    %v177 = vld [vmem:[#allocation5 + $0x3] sm:$0x1]
    %v178 = vld [vmem:[#allocation5 + $0x7] sm:$0x1]
    %179 = vset.pattern.permute.xlu0 3
    %180 = vperm.xlu0 %179, %v72
    %v181 = vpop.permute.xlu0 %180
    %v183 = vlaneseq
    %v184 = vshrl.u32 %v183, 7
    %v185 = vsub.s32 0, %v184
    %v186 = vrot.slane %v181, %v185
    %187 = vset.pattern.permute.xlu0 3
    %188 = vperm.xlu0 %187, %v79
    %v189 = vpop.permute.xlu0 %188
    %v191 = vlaneseq
    %v192 = vshrl.u32 %v191, 7
    %v193 = vsub.s32 0, %v192
    %v194 = vrot.slane %v189, %v193
    %v195 = vadd.f32 %v177, %v186
    %v196 = vadd.f32 %v178, %v194
    %s197 = scalar_lea.vmem [#allocation7], 12
    %v198 = vld [vmem:[%s197] sm:$0xf]
    %v199 = vlaneseq
    %v200 = vshrl.u32 %v199, 7
    %v201 = vsub.s32 0, %v200
    %v202 = vrot.slane %v195, %v201
    %v203 = vlaneseq
    %v204 = vshrl.u32 %v203, 7
    %v205 = vsub.s32 0, %v204
    %v206 = vrot.slane %v196, %v205
    %v207 = vmul.f32 %v202, %v198
    %v208 = vmul.f32 %v206, %v198
    %v209 = vadd.f32 %v175, %v207
    %v210 = vadd.f32 %v176, %v208
    %vm211 = vcmask 125952
    %212 = vst.msk [vmem:[#allocation8] sm:$0xf] %vm211, %v209
    %213 = vst.msk [vmem:[#allocation8 + $0x4] sm:$0xf] %vm211, %v210
    // Predicated region
    $region26: #{tpu_custom_call.1} parent=1 // pred_check
      _
    $region27: #{tpu_custom_call.1} parent=1 // pred_check_branch
      %215 = sbr.rel (0) target = $region29
    $region28: #{tpu_custom_call.1} parent=1 // pred_region
      %s217 = ssub.s32 128, 128
      %218 = vsyncadd [#allocation4], %s217
      %s219 = sshll.u32 [#allocation8], 4
      %s220 = int_to_ptr.vmem [resolvable:$true] %s219
      %225 = dma.vmem_to_hbm [thread:$0]  %s220, 128, %s3, [#allocation4], 64, 64, 4
    $region29: #{tpu_custom_call.1} parent=1 // pred_fallthru
      _
    // Predicated region
    $region30: #{tpu_custom_call.1} parent=1 // pred_check
      _
    $region31: #{tpu_custom_call.1} parent=1 // pred_check_branch
      %227 = sbr.rel (0) target = $region33
    $region32: #{tpu_custom_call.1} parent=1 // pred_region
      %228 = dma.done [#allocation4], 128
    $region33: #{tpu_custom_call.1} parent=1 // pred_fallthru
      _
    %229 = vsyncpa [#allocation3], 1
    %230 = vsyncpa [#allocation6], 1
    %231 = vsyncpa [#allocation4], 1

</llo_original>
